<compile_context>
chip_gen: v7x
topology: tpu7x:2x2x1
jax: 0.10.0
libtpu: 0.0.40
codegen_flags: <defaults>
</compile_context>

<pallas_src>
import math

import numpy as np
import jax
import jax.numpy as jnp
from jax.experimental import pallas as pl
from jax.experimental.pallas import tpu as pltpu

# ----------------------------- problem sizes -------------------------------
B = 2            # number of environments (batch)
N = 4            # samples_per_env
BN = B * N
HOR = 8          # planning horizon
DU = 2           # control dim
DS = 4           # state dim (x, y, vx, vy)
HD = HOR * DU    # flattened control trajectory dim = 16
SDF_RES = 16
SDF_FLAT = SDF_RES * SDF_RES     # 256
H1 = 32          # SDF-encoder hidden width
ZE = 16          # SDF latent dim
H2 = 32          # context-MLP hidden width
CTX = 2 * DS + ZE                # 24 (start ++ goal ++ env latent)
DT = 0.1
CTRL_W = 0.1     # running control-cost weight inside the trajectory cost
LOG_2PI = math.log(2.0 * math.pi)

# -------- packed weight-slab layouts (bf16; matmul row-starts 16-aligned) ---
# narrow slab: (NW_ROWS, 128)
NW_COLS = 128
R_W2 = 0                     # (32, 16)
R_W4 = 32                    # (24, 32)
R_W5 = 64                    # (32, 32)
R_ROLL = 96                  # (24, 16) = [A_rollout ; SG_base_minus_goal]
R_REP = 128                  # (8, 2)   constant one-hot env selector
R_B1 = 144                   # biases, one 8-aligned row each
R_B2 = 152
R_B4 = 160
R_B5 = 168
NW_ROWS = 176

# wide slab: (WW_ROWS, 256)
R_W3 = 0                     # (16, 256)
R_B3 = 16                    # (1, 256)
R_W1T = 32                   # (32, 256)  w1 stored TRANSPOSED (lane-dense)
WW_ROWS = 64

# output lane layout: single lane-dense (BN, 128) block = one vreg
OUT_W = 128
L_LOGQ = HD          # 16
L_TOT = HD + 1       # 17
L_COST = HD + 2      # 18
L_LQM = HD + 3       # 19
L_LPM = HD + 4       # 20
L_REG = HD + 5       # 21


def _mm(a, b):
    """bf16 MXU matmul with f32 accumulation."""
    return jnp.dot(a.astype(jnp.bfloat16), b.astype(jnp.bfloat16),
                   preferred_element_type=jnp.float32)


# ------------------------------- the kernel --------------------------------
def trainer_kernel(hyper_ref, sdf_ref, sgr_ref, eps_ref, wn_ref, ww_ref, out_ref):
    f32 = jnp.float32
    bf16 = jnp.bfloat16

    # ---- per-call data (all f32) ----
    sdf = sdf_ref[...]                          # (B, 256)
    sg_rep = sgr_ref[...]                       # (BN, 8)  [start|goal] replicated
    eps = eps_ref[...]                          # (BN, 16) N(0,1)

    # ---- packed weights (bf16, static slices) ----
    w1t = ww_ref[R_W1T:R_W1T + H1, :]           # (32, 256) transposed w1
    w3 = ww_ref[R_W3:R_W3 + ZE, :]              # (16, 256)
    b3 = ww_ref[R_B3:R_B3 + 1, :].astype(f32)   # (1, 256)

    w2 = wn_ref[R_W2:R_W2 + H1, 0:ZE]
    w4 = wn_ref[R_W4:R_W4 + CTX, 0:H2]
    w5 = wn_ref[R_W5:R_W5 + H2, 0:2 * HD]
    roll = wn_ref[R_ROLL:R_ROLL + CTX, 0:HD]    # stacked (24, 16) rollout matrix
    rep = wn_ref[R_REP:R_REP + BN, 0:B]         # (BN, B) constant one-hot selector
    b1 = wn_ref[R_B1:R_B1 + 1, 0:H1].astype(f32)
    b2 = wn_ref[R_B2:R_B2 + 1, 0:ZE].astype(f32)
    b4 = wn_ref[R_B4:R_B4 + 1, 0:H2].astype(f32)
    b5 = wn_ref[R_B5:R_B5 + 1, 0:2 * HD].astype(f32)

    # ---- environment (SDF) encoder + reconstruction (MXU, f32 acc) ----
    # lane-dense transposed-w1 contraction: (B,256) x (32,256)^T -> (B,32)
    h1_pre = jax.lax.dot_general(
        sdf.astype(bf16), w1t,
        dimension_numbers=(((1,), (1,)), ((), ())),
        preferred_element_type=f32) + b1
    h1 = jnp.maximum(h1_pre, 0.0)                                   # (B, 32)
    z = _mm(h1, w2) + b2                                            # (B, 16)
    recon = _mm(z, w3) + b3                                         # (B, 256)
    log_p_env = (-0.5 * jnp.sum((recon - sdf) ** 2, axis=-1, keepdims=True)
                 - 0.5 * SDF_FLAT * LOG_2PI)                        # (B, 1)
    reg = 0.5 * jnp.sum(z * z, axis=-1, keepdims=True)              # (B, 1)

    # ---- conditional Gaussian over U, directly at sample resolution ----
    z_rep = _mm(rep, z)                                             # (BN, 16)
    ctx = jnp.concatenate([sg_rep, z_rep], axis=-1)                 # (BN, 24)
    h2 = jnp.maximum(_mm(ctx, w4) + b4, 0.0)                        # (BN, 32)
    mlp_out = _mm(h2, w5) + b5                                      # (BN, 32)
    mu = mlp_out[:, :HD]
    log_sig = jnp.clip(mlp_out[:, HD:], -6.0, 4.0)   # safety clamp: keep exp finite

    # ---- reparameterized sample of U and its log-density log q(U) ----
    sig = jnp.exp(log_sig)
    U = mu + sig * eps                                              # (BN, 16)
    log_qU = (-0.5 * jnp.sum(eps * eps, axis=-1, keepdims=True)
              - jnp.sum(log_sig, axis=-1, keepdims=True)
              - 0.5 * HD * LOG_2PI)                                 # (BN, 1)

    # ---- closed-form double-integrator rollout + quadratic costs ----
    # pos_t - goal (all t, stacked on lanes) = [U | start|goal] @ [A ; SG]
    usg = jnp.concatenate([U, sg_rep], axis=-1)                     # (BN, 24)
    diff = _mm(usg, roll)                                           # (BN, 16)
    cost = (jnp.sum(diff * diff, axis=-1, keepdims=True)
            + CTRL_W * jnp.sum(U * U, axis=-1, keepdims=True))      # (BN, 1)

    # ---- weighted loss aggregation ----
    alpha = hyper_ref[0]
    beta = hyper_ref[1]
    gamma = hyper_ref[2]
    kappa = hyper_ref[3]
    cost_m = jnp.mean(cost, keepdims=True)                          # (1, 1)
    logq_m = jnp.mean(log_qU, keepdims=True)
    logp_m = jnp.mean(log_p_env, keepdims=True)
    reg_m = jnp.mean(reg, keepdims=True)
    total = (alpha * cost_m + beta * logq_m - gamma * logp_m + kappa * reg_m)

    # ---- compose output in registers, single full-vreg store ----
    scalars = jnp.concatenate([total, cost_m, logq_m, logp_m, reg_m], axis=-1)  # (1,5)
    out_ref[...] = jnp.concatenate(
        [U, log_qU,
         jnp.broadcast_to(scalars, (BN, 5)),
         jnp.zeros((BN, OUT_W - HD - 1 - 5), f32)], axis=-1)


# ------------------------------ host-side glue ------------------------------
def init_params(key):
    ks = jax.random.split(key, 5)

    def lin(k, fan_in, fan_out):
        w = (jax.random.normal(k, (fan_in, fan_out), jnp.float32)
             * (1.0 / math.sqrt(fan_in)))
        b = jnp.zeros((1, fan_out), jnp.float32)
        return w, b

    w1, b1 = lin(ks[0], SDF_FLAT, H1)
    w2, b2 = lin(ks[1], H1, ZE)
    w3, b3 = lin(ks[2], ZE, SDF_FLAT)
    w4, b4 = lin(ks[3], CTX, H2)
    w5, b5 = lin(ks[4], H2, 2 * HD)
    return (w1, b1, w2, b2, w3, b3, w4, b4, w5, b5)


def _rollout_matrices():
    """Constant matrices for the closed-form semi-implicit-Euler rollout.

    pos_t - goal = start_pos - goal_pos + DT*(t+1)*start_vel
                   + DT^2 * sum_{s<=t} (t-s+1) * u_s
    """
    a = np.zeros((HD, HD), np.float32)
    for t in range(HOR):
        for s in range(t + 1):
            for d in range(DU):
                a[s * DU + d, t * DU + d] = DT * DT * (t - s + 1)
    sg = np.zeros((2 * DS, HD), np.float32)
    for t in range(HOR):
        for d in range(DU):
            sg[d, t * DU + d] = 1.0               # start position
            sg[2 + d, t * DU + d] = DT * (t + 1)  # start velocity
            sg[DS + d, t * DU + d] = -1.0         # goal position
    return a, sg


def pack_weights(params):
    """Pack weights/biases + constant matrices into two lane-dense bf16 slabs."""
    w1, b1, w2, b2, w3, b3, w4, b4, w5, b5 = params
    a_roll, sg_mat = _rollout_matrices()
    roll = np.concatenate([a_roll, sg_mat], axis=0)               # (24, 16)
    rep = np.repeat(np.eye(B, dtype=np.float32), N, axis=0)       # (BN, B)

    wn = np.zeros((NW_ROWS, NW_COLS), np.float32)
    wn[R_W2:R_W2 + H1, :ZE] = np.asarray(w2)
    wn[R_W4:R_W4 + CTX, :H2] = np.asarray(w4)
    wn[R_W5:R_W5 + H2, :2 * HD] = np.asarray(w5)
    wn[R_ROLL:R_ROLL + CTX, :HD] = roll
    wn[R_REP:R_REP + BN, :B] = rep
    wn[R_B1, :H1] = np.asarray(b1)[0]
    wn[R_B2, :ZE] = np.asarray(b2)[0]
    wn[R_B4, :H2] = np.asarray(b4)[0]
    wn[R_B5, :2 * HD] = np.asarray(b5)[0]

    ww = np.zeros((WW_ROWS, SDF_FLAT), np.float32)
    ww[R_W3:R_W3 + ZE, :] = np.asarray(w3)
    ww[R_B3, :] = np.asarray(b3)[0]
    ww[R_W1T:R_W1T + H1, :] = np.asarray(w1).T                    # lane-dense w1^T
    return (jnp.asarray(wn, dtype=jnp.bfloat16),
            jnp.asarray(ww, dtype=jnp.bfloat16))


@jax.jit
def _forward_core(wn, ww, starts, goals, sdf, eps, hyper):
    sdf_flat = sdf.reshape(B, SDF_FLAT).astype(jnp.float32)       # NCHW -> [B, 256]
    sg = jnp.concatenate([starts, goals], axis=-1)                # (B, 8)
    sg_rep = jnp.repeat(sg, N, axis=0)                            # (BN, 8)

    vmem = pl.BlockSpec(memory_space=pltpu.MemorySpace.VMEM)
    smem = pl.BlockSpec(memory_space=pltpu.MemorySpace.SMEM)
    # NOTE: gridless on purpose — whole problem is < 0.2 MiB.  On v7x this uses
    # a single TensorCore; if B*N grows, add a leading grid axis over sample-row
    # blocks with dimension_semantics=("parallel",) and re-check the 64 MiB VMEM.
    blk = pl.pallas_call(
        trainer_kernel,
        out_shape=jax.ShapeDtypeStruct((BN, OUT_W), jnp.float32),
        in_specs=[smem, vmem, vmem, vmem, vmem, vmem],
        out_specs=vmem,
    )(hyper, sdf_flat, sg_rep, eps, wn, ww)

    U_out = blk[:, :HD].reshape(B, N, HOR, DU)
    log_qU = blk[:, L_LOGQ].reshape(B, N)
    loss_vec = blk[0, L_TOT:L_REG + 1]                            # (5,)
    return loss_vec, U_out, log_qU


def trainer_forward(packed_weights, starts, goals, sdf, sdf_grad, U,
                    samples_per_env, alpha, beta, gamma, kappa, noise_key,
                    sigma=None, plot=False, reconstruct=True):
    """Pallas equivalent of Trainer.forward (U is None -> sample-from-prior path)."""
    if U is not None:
        # TODO(synk): likelihood-of-given-U path (planning_network.likelihood) not implemented.
        raise NotImplementedError("only the U=None sampling path is implemented")
    del sdf_grad, sigma, plot, reconstruct  # TODO(synk): sdf_grad collision term needs dynamic gather
    assert samples_per_env == N, "kernel is specialized to samples_per_env == N"

    eps = jax.random.normal(noise_key, (BN, HD), jnp.float32)
    hyper = jnp.array([alpha, beta, gamma, kappa], jnp.float32)
    wn, ww = packed_weights

    loss_vec, U_out, log_qU = _forward_core(wn, ww, starts, goals, sdf, eps, hyper)
    loss_dict = {
        "total_loss": loss_vec[0],
        "trajectory_cost": loss_vec[1],
        "log_qU": loss_vec[2],
        "log_p_env": loss_vec[3],
        "reg": loss_vec[4],
    }
    return loss_dict, U_out, log_qU


# ---------------------------------- main ------------------------------------
if __name__ == "__main__":
    key = jax.random.PRNGKey(0)
    kp, k_s, k_g, k_sdf, k_grad, k_eps = jax.random.split(key, 6)

    params = init_params(kp)
    packed_weights = pack_weights(params)

    starts = jax.random.normal(k_s, (B, DS), jnp.float32)
    goals = jax.random.normal(k_g, (B, DS), jnp.float32)
    sdf = jax.random.normal(k_sdf, (B, 1, SDF_RES, SDF_RES), jnp.float32)      # NCHW
    sdf_grad = jax.random.normal(k_grad, (B, 2, SDF_RES, SDF_RES), jnp.float32)

    loss_dict, U_samples, log_qU = trainer_forward(
        packed_weights, starts, goals, sdf, sdf_grad,
        U=None, samples_per_env=N,
        alpha=1.0, beta=0.1, gamma=0.01, kappa=0.001,
        noise_key=k_eps,
    )
    jax.block_until_ready(loss_dict["total_loss"])

    assert U_samples.shape == (B, N, HOR, DU)
    assert log_qU.shape == (B, N)
    for k, v in loss_dict.items():
        assert bool(jnp.isfinite(v)), f"non-finite loss component {k}"
    print("KERNEL_OK")
</pallas_src>

<mosaic_0001>
module attributes {stable_mosaic.version = 11 : i64} {
  func.func @trainer_kernel(%arg0: memref<4xf32, #tpu.memory_space<smem>>, %arg1: memref<2x256xf32, #tpu.memory_space<vmem>>, %arg2: memref<8x8xf32, #tpu.memory_space<vmem>>, %arg3: memref<8x16xf32, #tpu.memory_space<vmem>>, %arg4: memref<176x128xbf16, #tpu.memory_space<vmem>>, %arg5: memref<64x256xbf16, #tpu.memory_space<vmem>>, %arg6: memref<8x128xf32, #tpu.memory_space<vmem>>) attributes {dimension_semantics = [], scalar_prefetch = 0 : i64, scratch_operands = 0 : i64, tpu.core_type = #tpu.core_type<tc>} {
    %c0 = arith.constant 0 : index
    %c0_0 = arith.constant 0 : index
    %0 = vector.load %arg1[%c0, %c0_0] : memref<2x256xf32, #tpu.memory_space<vmem>>, vector<2x256xf32>
    %c0_1 = arith.constant 0 : index
    %c0_2 = arith.constant 0 : index
    %1 = vector.load %arg2[%c0_1, %c0_2] : memref<8x8xf32, #tpu.memory_space<vmem>>, vector<8x8xf32>
    %c0_3 = arith.constant 0 : index
    %c0_4 = arith.constant 0 : index
    %2 = vector.load %arg3[%c0_3, %c0_4] : memref<8x16xf32, #tpu.memory_space<vmem>>, vector<8x16xf32>
    %c32 = arith.constant 32 : index
    %c0_5 = arith.constant 0 : index
    %3 = vector.load %arg5[%c32, %c0_5] : memref<64x256xbf16, #tpu.memory_space<vmem>>, vector<32x256xbf16>
    %c0_6 = arith.constant 0 : index
    %c0_7 = arith.constant 0 : index
    %4 = vector.load %arg5[%c0_6, %c0_7] : memref<64x256xbf16, #tpu.memory_space<vmem>>, vector<16x256xbf16>
    %c16 = arith.constant 16 : index
    %c0_8 = arith.constant 0 : index
    %5 = vector.load %arg5[%c16, %c0_8] : memref<64x256xbf16, #tpu.memory_space<vmem>>, vector<1x256xbf16>
    %6 = arith.extf %5 : vector<1x256xbf16> to vector<1x256xf32>
    %c0_9 = arith.constant 0 : index
    %c0_10 = arith.constant 0 : index
    %7 = vector.load %arg4[%c0_9, %c0_10] : memref<176x128xbf16, #tpu.memory_space<vmem>>, vector<32x16xbf16>
    %c32_11 = arith.constant 32 : index
    %c0_12 = arith.constant 0 : index
    %8 = vector.load %arg4[%c32_11, %c0_12] : memref<176x128xbf16, #tpu.memory_space<vmem>>, vector<24x32xbf16>
    %c64 = arith.constant 64 : index
    %c0_13 = arith.constant 0 : index
    %9 = vector.load %arg4[%c64, %c0_13] : memref<176x128xbf16, #tpu.memory_space<vmem>>, vector<32x32xbf16>
    %c96 = arith.constant 96 : index
    %c0_14 = arith.constant 0 : index
    %10 = vector.load %arg4[%c96, %c0_14] : memref<176x128xbf16, #tpu.memory_space<vmem>>, vector<24x16xbf16>
    %c128 = arith.constant 128 : index
    %c0_15 = arith.constant 0 : index
    %11 = vector.load %arg4[%c128, %c0_15] : memref<176x128xbf16, #tpu.memory_space<vmem>>, vector<8x2xbf16>
    %c144 = arith.constant 144 : index
    %c0_16 = arith.constant 0 : index
    %12 = vector.load %arg4[%c144, %c0_16] : memref<176x128xbf16, #tpu.memory_space<vmem>>, vector<1x32xbf16>
    %13 = arith.extf %12 : vector<1x32xbf16> to vector<1x32xf32>
    %c152 = arith.constant 152 : index
    %c0_17 = arith.constant 0 : index
    %14 = vector.load %arg4[%c152, %c0_17] : memref<176x128xbf16, #tpu.memory_space<vmem>>, vector<1x16xbf16>
    %15 = arith.extf %14 : vector<1x16xbf16> to vector<1x16xf32>
    %c160 = arith.constant 160 : index
    %c0_18 = arith.constant 0 : index
    %16 = vector.load %arg4[%c160, %c0_18] : memref<176x128xbf16, #tpu.memory_space<vmem>>, vector<1x32xbf16>
    %17 = arith.extf %16 : vector<1x32xbf16> to vector<1x32xf32>
    %c168 = arith.constant 168 : index
    %c0_19 = arith.constant 0 : index
    %18 = vector.load %arg4[%c168, %c0_19] : memref<176x128xbf16, #tpu.memory_space<vmem>>, vector<1x32xbf16>
    %19 = arith.extf %18 : vector<1x32xbf16> to vector<1x32xf32>
    %20 = arith.truncf %0 : vector<2x256xf32> to vector<2x256xbf16>
    %cst = arith.constant dense<0.000000e+00> : vector<2x32xf32>
    %21 = tpu.matmul %20, %3, %cst {dimension_numbers = #tpu.dot_dimension_numbers<[1], [1], [0], [0], [0, 0, 1, 0], [], []>} : vector<2x256xbf16>, vector<32x256xbf16>, vector<2x32xf32> -> vector<2x32xf32>
    %22 = vector.broadcast %13 : vector<1x32xf32> to vector<2x32xf32>
    %23 = arith.addf %21, %22 : vector<2x32xf32>
    %cst_20 = arith.constant 0.000000e+00 : f32
    %24 = vector.broadcast %cst_20 : f32 to vector<2x32xf32>
    %25 = arith.maximumf %23, %24 : vector<2x32xf32>
    %26 = arith.truncf %25 : vector<2x32xf32> to vector<2x32xbf16>
    %cst_21 = arith.constant dense<0.000000e+00> : vector<2x16xf32>
    %27 = tpu.matmul %26, %7, %cst_21 {dimension_numbers = #tpu.dot_dimension_numbers<[1], [0], [0], [1], [0, 0, 1, 1], [], []>} : vector<2x32xbf16>, vector<32x16xbf16>, vector<2x16xf32> -> vector<2x16xf32>
    %28 = vector.broadcast %15 : vector<1x16xf32> to vector<2x16xf32>
    %29 = arith.addf %27, %28 : vector<2x16xf32>
    %30 = arith.truncf %29 : vector<2x16xf32> to vector<2x16xbf16>
    %cst_22 = arith.constant dense<0.000000e+00> : vector<2x256xf32>
    %31 = tpu.matmul %30, %4, %cst_22 {dimension_numbers = #tpu.dot_dimension_numbers<[1], [0], [0], [1], [0, 0, 1, 1], [], []>} : vector<2x16xbf16>, vector<16x256xbf16>, vector<2x256xf32> -> vector<2x256xf32>
    %32 = vector.broadcast %6 : vector<1x256xf32> to vector<2x256xf32>
    %33 = arith.addf %31, %32 : vector<2x256xf32>
    %34 = arith.subf %33, %0 : vector<2x256xf32>
    %35 = arith.mulf %34, %34 : vector<2x256xf32>
    %cst_23 = arith.constant dense<0.000000e+00> : vector<2xf32>
    %36 = vector.multi_reduction <add>, %35, %cst_23 [1] : vector<2x256xf32> to vector<2xf32>
    %37 = vector.shape_cast %36 : vector<2xf32> to vector<2x1xf32>
    %cst_24 = arith.constant -5.000000e-01 : f32
    %38 = vector.broadcast %cst_24 : f32 to vector<2x1xf32>
    %39 = arith.mulf %38, %37 : vector<2x1xf32>
    %cst_25 = arith.constant 235.24826 : f32
    %40 = vector.broadcast %cst_25 : f32 to vector<2x1xf32>
    %41 = arith.subf %39, %40 : vector<2x1xf32>
    %42 = arith.mulf %29, %29 : vector<2x16xf32>
    %cst_26 = arith.constant dense<0.000000e+00> : vector<2xf32>
    %43 = vector.multi_reduction <add>, %42, %cst_26 [1] : vector<2x16xf32> to vector<2xf32>
    %44 = vector.shape_cast %43 : vector<2xf32> to vector<2x1xf32>
    %cst_27 = arith.constant 5.000000e-01 : f32
    %45 = vector.broadcast %cst_27 : f32 to vector<2x1xf32>
    %46 = arith.mulf %45, %44 : vector<2x1xf32>
    %47 = arith.truncf %29 : vector<2x16xf32> to vector<2x16xbf16>
    %cst_28 = arith.constant dense<0.000000e+00> : vector<8x16xf32>
    %48 = tpu.matmul %11, %47, %cst_28 {dimension_numbers = #tpu.dot_dimension_numbers<[1], [0], [0], [1], [0, 0, 1, 1], [], []>} : vector<8x2xbf16>, vector<2x16xbf16>, vector<8x16xf32> -> vector<8x16xf32>
    %49 = tpu.concatenate %1, %48 in 1 : vector<8x8xf32>, vector<8x16xf32> -> vector<8x24xf32>
    %50 = arith.truncf %49 : vector<8x24xf32> to vector<8x24xbf16>
    %cst_29 = arith.constant dense<0.000000e+00> : vector<8x32xf32>
    %51 = tpu.matmul %50, %8, %cst_29 {dimension_numbers = #tpu.dot_dimension_numbers<[1], [0], [0], [1], [0, 0, 1, 1], [], []>} : vector<8x24xbf16>, vector<24x32xbf16>, vector<8x32xf32> -> vector<8x32xf32>
    %52 = vector.broadcast %17 : vector<1x32xf32> to vector<8x32xf32>
    %53 = arith.addf %51, %52 : vector<8x32xf32>
    %cst_30 = arith.constant 0.000000e+00 : f32
    %54 = vector.broadcast %cst_30 : f32 to vector<8x32xf32>
    %55 = arith.maximumf %53, %54 : vector<8x32xf32>
    %56 = arith.truncf %55 : vector<8x32xf32> to vector<8x32xbf16>
    %cst_31 = arith.constant dense<0.000000e+00> : vector<8x32xf32>
    %57 = tpu.matmul %56, %9, %cst_31 {dimension_numbers = #tpu.dot_dimension_numbers<[1], [0], [0], [1], [0, 0, 1, 1], [], []>} : vector<8x32xbf16>, vector<32x32xbf16>, vector<8x32xf32> -> vector<8x32xf32>
    %58 = vector.broadcast %19 : vector<1x32xf32> to vector<8x32xf32>
    %59 = arith.addf %57, %58 : vector<8x32xf32>
    %60 = vector.extract_strided_slice %59 {offsets = [0, 0], sizes = [8, 16], strides = [1, 1]} : vector<8x32xf32> to vector<8x16xf32>
    %61 = vector.extract_strided_slice %59 {offsets = [0, 16], sizes = [8, 16], strides = [1, 1]} : vector<8x32xf32> to vector<8x16xf32>
    %cst_32 = arith.constant -6.000000e+00 : f32
    %cst_33 = arith.constant 4.000000e+00 : f32
    %62 = vector.broadcast %cst_32 : f32 to vector<8x16xf32>
    %63 = arith.maximumf %62, %61 : vector<8x16xf32>
    %64 = vector.broadcast %cst_33 : f32 to vector<8x16xf32>
    %65 = arith.minimumf %64, %63 : vector<8x16xf32>
    %66 = math.exp %65 : vector<8x16xf32>
    %67 = arith.mulf %66, %2 : vector<8x16xf32>
    %68 = arith.addf %60, %67 : vector<8x16xf32>
    %69 = arith.mulf %2, %2 : vector<8x16xf32>
    %cst_34 = arith.constant dense<0.000000e+00> : vector<8xf32>
    %70 = vector.multi_reduction <add>, %69, %cst_34 [1] : vector<8x16xf32> to vector<8xf32>
    %71 = vector.shape_cast %70 : vector<8xf32> to vector<8x1xf32>
    %cst_35 = arith.constant -5.000000e-01 : f32
    %72 = vector.broadcast %cst_35 : f32 to vector<8x1xf32>
    %73 = arith.mulf %72, %71 : vector<8x1xf32>
    %cst_36 = arith.constant dense<0.000000e+00> : vector<8xf32>
    %74 = vector.multi_reduction <add>, %65, %cst_36 [1] : vector<8x16xf32> to vector<8xf32>
    %75 = vector.shape_cast %74 : vector<8xf32> to vector<8x1xf32>
    %76 = arith.subf %73, %75 : vector<8x1xf32>
    %cst_37 = arith.constant 14.7030163 : f32
    %77 = vector.broadcast %cst_37 : f32 to vector<8x1xf32>
    %78 = arith.subf %76, %77 : vector<8x1xf32>
    %79 = tpu.concatenate %68, %1 in 1 : vector<8x16xf32>, vector<8x8xf32> -> vector<8x24xf32>
    %80 = arith.truncf %79 : vector<8x24xf32> to vector<8x24xbf16>
    %cst_38 = arith.constant dense<0.000000e+00> : vector<8x16xf32>
    %81 = tpu.matmul %80, %10, %cst_38 {dimension_numbers = #tpu.dot_dimension_numbers<[1], [0], [0], [1], [0, 0, 1, 1], [], []>} : vector<8x24xbf16>, vector<24x16xbf16>, vector<8x16xf32> -> vector<8x16xf32>
    %82 = arith.mulf %81, %81 : vector<8x16xf32>
    %cst_39 = arith.constant dense<0.000000e+00> : vector<8xf32>
    %83 = vector.multi_reduction <add>, %82, %cst_39 [1] : vector<8x16xf32> to vector<8xf32>
    %84 = vector.shape_cast %83 : vector<8xf32> to vector<8x1xf32>
    %85 = arith.mulf %68, %68 : vector<8x16xf32>
    %cst_40 = arith.constant dense<0.000000e+00> : vector<8xf32>
    %86 = vector.multi_reduction <add>, %85, %cst_40 [1] : vector<8x16xf32> to vector<8xf32>
    %87 = vector.shape_cast %86 : vector<8xf32> to vector<8x1xf32>
    %cst_41 = arith.constant 1.000000e-01 : f32
    %88 = vector.broadcast %cst_41 : f32 to vector<8x1xf32>
    %89 = arith.mulf %88, %87 : vector<8x1xf32>
    %90 = arith.addf %84, %89 : vector<8x1xf32>
    %c0_42 = arith.constant 0 : index
    %91 = memref.load %arg0[%c0_42] : memref<4xf32, #tpu.memory_space<smem>>
    %c1 = arith.constant 1 : index
    %92 = memref.load %arg0[%c1] : memref<4xf32, #tpu.memory_space<smem>>
    %c2 = arith.constant 2 : index
    %93 = memref.load %arg0[%c2] : memref<4xf32, #tpu.memory_space<smem>>
    %c3 = arith.constant 3 : index
    %94 = memref.load %arg0[%c3] : memref<4xf32, #tpu.memory_space<smem>>
    %95 = vector.shape_cast %90 : vector<8x1xf32> to vector<1x8x1xf32>
    %cst_43 = arith.constant dense<0.000000e+00> : vector<1xf32>
    %96 = vector.multi_reduction <add>, %95, %cst_43 [1, 2] : vector<1x8x1xf32> to vector<1xf32>
    %97 = vector.shape_cast %96 : vector<1xf32> to vector<1x1x1xf32>
    %98 = vector.extract %97[0, 0, 0] : f32 from vector<1x1x1xf32>
    %99 = vector.broadcast %98 : f32 to vector<1x1xf32>
    %cst_44 = arith.constant 8.000000e+00 : f32
    %100 = vector.broadcast %cst_44 : f32 to vector<1x1xf32>
    %101 = arith.divf %99, %100 : vector<1x1xf32>
    %102 = vector.shape_cast %78 : vector<8x1xf32> to vector<1x8x1xf32>
    %cst_45 = arith.constant dense<0.000000e+00> : vector<1xf32>
    %103 = vector.multi_reduction <add>, %102, %cst_45 [1, 2] : vector<1x8x1xf32> to vector<1xf32>
    %104 = vector.shape_cast %103 : vector<1xf32> to vector<1x1x1xf32>
    %105 = vector.extract %104[0, 0, 0] : f32 from vector<1x1x1xf32>
    %106 = vector.broadcast %105 : f32 to vector<1x1xf32>
    %cst_46 = arith.constant 8.000000e+00 : f32
    %107 = vector.broadcast %cst_46 : f32 to vector<1x1xf32>
    %108 = arith.divf %106, %107 : vector<1x1xf32>
    %109 = vector.shape_cast %41 : vector<2x1xf32> to vector<1x2x1xf32>
    %cst_47 = arith.constant dense<0.000000e+00> : vector<1xf32>
    %110 = vector.multi_reduction <add>, %109, %cst_47 [1, 2] : vector<1x2x1xf32> to vector<1xf32>
    %111 = vector.shape_cast %110 : vector<1xf32> to vector<1x1x1xf32>
    %112 = vector.extract %111[0, 0, 0] : f32 from vector<1x1x1xf32>
    %113 = vector.broadcast %112 : f32 to vector<1x1xf32>
    %cst_48 = arith.constant 2.000000e+00 : f32
    %114 = vector.broadcast %cst_48 : f32 to vector<1x1xf32>
    %115 = arith.divf %113, %114 : vector<1x1xf32>
    %116 = vector.shape_cast %46 : vector<2x1xf32> to vector<1x2x1xf32>
    %cst_49 = arith.constant dense<0.000000e+00> : vector<1xf32>
    %117 = vector.multi_reduction <add>, %116, %cst_49 [1, 2] : vector<1x2x1xf32> to vector<1xf32>
    %118 = vector.shape_cast %117 : vector<1xf32> to vector<1x1x1xf32>
    %119 = vector.extract %118[0, 0, 0] : f32 from vector<1x1x1xf32>
    %120 = vector.broadcast %119 : f32 to vector<1x1xf32>
    %cst_50 = arith.constant 2.000000e+00 : f32
    %121 = vector.broadcast %cst_50 : f32 to vector<1x1xf32>
    %122 = arith.divf %120, %121 : vector<1x1xf32>
    %123 = vector.broadcast %91 : f32 to vector<1x1xf32>
    %124 = arith.mulf %123, %101 : vector<1x1xf32>
    %125 = vector.broadcast %92 : f32 to vector<1x1xf32>
    %126 = arith.mulf %125, %108 : vector<1x1xf32>
    %127 = arith.addf %124, %126 : vector<1x1xf32>
    %128 = vector.broadcast %93 : f32 to vector<1x1xf32>
    %129 = arith.mulf %128, %115 : vector<1x1xf32>
    %130 = arith.subf %127, %129 : vector<1x1xf32>
    %131 = vector.broadcast %94 : f32 to vector<1x1xf32>
    %132 = arith.mulf %131, %122 : vector<1x1xf32>
    %133 = arith.addf %130, %132 : vector<1x1xf32>
    %134 = tpu.concatenate %133, %101, %108, %115, %122 in 1 : vector<1x1xf32>, vector<1x1xf32>, vector<1x1xf32>, vector<1x1xf32>, vector<1x1xf32> -> vector<1x5xf32>
    %135 = vector.shape_cast %134 : vector<1x5xf32> to vector<1x5xf32>
    %136 = vector.broadcast %135 : vector<1x5xf32> to vector<8x5xf32>
    %cst_51 = arith.constant 0.000000e+00 : f32
    %137 = vector.broadcast %cst_51 : f32 to vector<8x106xf32>
    %138 = tpu.concatenate %68, %78, %136, %137 in 1 : vector<8x16xf32>, vector<8x1xf32>, vector<8x5xf32>, vector<8x106xf32> -> vector<8x128xf32>
    %c0_52 = arith.constant 0 : index
    %c0_53 = arith.constant 0 : index
    %139 = vector.load %arg6[%c0_52, %c0_53] : memref<8x128xf32, #tpu.memory_space<vmem>>, vector<8x128xf32>
    tpu.vector_store %arg6[%c0_52, %c0_53], %138 {strides = array<i32>} : memref<8x128xf32, #tpu.memory_space<vmem>>, vector<8x128xf32>,
    return
  }
}

</mosaic_0001>

<llo_original>
// kernel: squeeze.2
$region0: #{squeeze.2}
  %s0 = inlined_call_operand.vmem [shape: f32[8], index: 0, kind: input, shape index: {}]
  %s1 = inlined_call_operand.hbm [shape: f32[2,4], index: 1, kind: output, shape index: {}]
  $region1: #{squeeze.2} parent=0
    #allocation0 [shape = 'u8[1024]{0}', space=vmem, size = 0x400, scoped, tag = 'operand span for operand 1']
    #allocation1 [shape = 's32[1]{0}', space=sflag, size = 0x4, scoped, tag = 'scoped memory for squeeze.2']
    #allocation2 [shape = 'u8[4096]{0}', space=vmem, size = 0x1000, scoped, tag = 'scoped mem for output reshape']
    #allocation3 [shape = 'u8[4096]{0}', space=vmem, size = 0x1000, scoped, tag = 'scoped mem for input reshape']
    %2 = vsyncpa [#allocation1], 0
    %s4 = sshllo.u32 0, 1
    %v5 = vld [vmem:[%s0] sm:%s4]
    %6 = vst [vmem:[#allocation3] sm:%s4] %v5
    %v7 = vld [vmem:[#allocation3] sm:$0x1]
    %vm8 = vcmask 31744
    %9 = vst.msk [vmem:[#allocation2] sm:$0x1] %vm8, %v7
    %v10 = vld [vmem:[#allocation3] sm:$0x1]
    %11 = vrot.lane.b32.xlu0 %v10, 124
    %v12 = vpop.permute.xlu0 %11
    %vm13 = vcmask 31744
    %s14 = scalar_lea.vmem [#allocation2], 1
    %15 = vst.msk [vmem:[%s14] sm:$0x1] %vm13, %v12
    %s17 = sshllo.u32 0, 2
    %v19 = vld [vmem:[#allocation2] sm:%s17]
    %s20 = sshllo.u32 0, 2
    %21 = vst [vmem:[#allocation0] sm:%s20] %v19
    %s23 = ssub.s32 32, 32
    %24 = vsyncadd [#allocation1], %s23
    %s26 = sshll.u32 [#allocation0], 4
    %s27 = int_to_ptr.vmem [resolvable:$true] %s26
    %29 = dma.vmem_to_hbm [thread:$0]  %s27, 32, %s1, [#allocation1]
    %30 = dma.done [#allocation1], 32
    %31 = vsyncpa [#allocation1], 1

// kernel: _forward_core.1
$region0: #{_forward_core.1}
  #allocation0 [shape = 'u32[]', space=smem, size = 0x4, offset = 0x4, fixed_abs, tag = 'smem constant byte address 0x4 - core index']
  #allocation1 [shape = 'u32[144,128]{1,0:T(1,128)}', space=vmem, size = 0x12000, scoped, tag = 'internal scratch']
  %s0 = inlined_call_operand.vmem [shape: f32[4], index: 0, kind: input, shape index: {}]
  %s1 = inlined_call_operand.vmem [shape: f32[2,256], index: 1, kind: input, shape index: {}]
  %s2 = inlined_call_operand.vmem [shape: f32[8,8], index: 2, kind: input, shape index: {}]
  %s3 = inlined_call_operand.vmem [shape: f32[8,16], index: 3, kind: input, shape index: {}]
  %s4 = inlined_call_operand.hbm [shape: bf16[176,128], index: 4, kind: input, shape index: {}]
  %s5 = inlined_call_operand.hbm [shape: bf16[64,256], index: 5, kind: input, shape index: {}]
  %s6 = inlined_call_operand.vmem [shape: f32[8,128], index: 6, kind: output, shape index: {}]
  %s7 = sld [smem:[#allocation0]]
  $region46: #{_forward_core.1} parent=0
    _
  %s9 = ssub.s32 1, %s7
  %s10 = scalar_select 0, %s9, %s7
  $region1: #{_forward_core.1} parent=0
    #allocation2 [shape = 'u8[512]{0}', space=smem, size = 0x200, scoped, tag = 'input window, operand 0, single buffered']
    #allocation3 [shape = 's32[1]{0}', space=sflag, size = 0x4, scoped, tag = 'scoped memory for _forward_core.1']
    #allocation4 [shape = 's32[1]{0}', space=sflag, size = 0x4, scoped, tag = 'scoped memory for _forward_core.1']
    #allocation5 [shape = 'u8[45056]{0}', space=vmem, size = 0xb000, scoped, tag = 'input window, operand 4, single buffered']
    #allocation6 [shape = 'u8[32768]{0}', space=vmem, size = 0x8000, scoped, tag = 'input window, operand 5, single buffered']
    #allocation7 [shape = 's32[1]{0}', space=sflag, size = 0x4, scoped, tag = 'scoped memory for _forward_core.1']
    %11 = vsyncpa [#allocation4], 0
    %12 = vsyncpa [#allocation3], 0
    %13 = vsyncpa [#allocation7], 0
    // Predicated region
    $region2: #{_forward_core.1} parent=1 // pred_check
      _
    $region3: #{_forward_core.1} parent=1 // pred_check_branch
      %15 = sbr.rel (0) target = $region5
    $region4: #{_forward_core.1} parent=1 // pred_region
      %s17 = ssub.s32 16, 16
      %18 = vsyncadd [#allocation4], %s17
      %s20 = sshll.u32 %s0, 4
      %s21 = int_to_ptr.vmem [resolvable:$true] %s20
      %23 = dma.vmem_to_smem %s21, 16, [#allocation2], [#allocation4]
    $region5: #{_forward_core.1} parent=1 // pred_fallthru
      _
    // Predicated region
    $region6: #{_forward_core.1} parent=1 // pred_check
      _
    $region7: #{_forward_core.1} parent=1 // pred_check_branch
      %25 = sbr.rel (0) target = $region9
    $region8: #{_forward_core.1} parent=1 // pred_region
      _
    $region9: #{_forward_core.1} parent=1 // pred_fallthru
      _
    // Predicated region
    $region10: #{_forward_core.1} parent=1 // pred_check
      _
    $region11: #{_forward_core.1} parent=1 // pred_check_branch
      %27 = sbr.rel (0) target = $region13
    $region12: #{_forward_core.1} parent=1 // pred_region
      _
    $region13: #{_forward_core.1} parent=1 // pred_fallthru
      _
    // Predicated region
    $region14: #{_forward_core.1} parent=1 // pred_check
      _
    $region15: #{_forward_core.1} parent=1 // pred_check_branch
      %29 = sbr.rel (0) target = $region17
    $region16: #{_forward_core.1} parent=1 // pred_region
      _
    $region17: #{_forward_core.1} parent=1 // pred_fallthru
      _
    // Predicated region
    $region18: #{_forward_core.1} parent=1 // pred_check
      _
    $region19: #{_forward_core.1} parent=1 // pred_check_branch
      %31 = sbr.rel (0) target = $region21
    $region20: #{_forward_core.1} parent=1 // pred_region
      %s33 = ssub.s32 1408, 1408
      %34 = vsyncadd [#allocation3], %s33
      %s35 = sshll.u32 [#allocation5], 4
      %s36 = int_to_ptr.vmem [resolvable:$true] %s35
      %41 = dma.hbm_to_vmem [thread:$0]  %s4, 1408, %s36, [#allocation3], 64, 64, 4
    $region21: #{_forward_core.1} parent=1 // pred_fallthru
      _
    // Predicated region
    $region22: #{_forward_core.1} parent=1 // pred_check
      _
    $region23: #{_forward_core.1} parent=1 // pred_check_branch
      %43 = sbr.rel (0) target = $region25
    $region24: #{_forward_core.1} parent=1 // pred_region
      %s45 = ssub.s32 1024, 1024
      %46 = vsyncadd [#allocation7], %s45
      %s47 = sshll.u32 [#allocation6], 4
      %s48 = int_to_ptr.vmem [resolvable:$true] %s47
      %53 = dma.hbm_to_vmem [thread:$0]  %s5, 1024, %s48, [#allocation7], 128, 128, 8
    $region25: #{_forward_core.1} parent=1 // pred_fallthru
      _
    // Predicated region
    $region26: #{_forward_core.1} parent=1 // pred_check
      _
    $region27: #{_forward_core.1} parent=1 // pred_check_branch
      %55 = sbr.rel (0) target = $region29
    $region28: #{_forward_core.1} parent=1 // pred_region
      %56 = dma.done [#allocation4], 16
    $region29: #{_forward_core.1} parent=1 // pred_fallthru
      _
    // Predicated region
    $region30: #{_forward_core.1} parent=1 // pred_check
      _
    $region31: #{_forward_core.1} parent=1 // pred_check_branch
      %58 = sbr.rel (0) target = $region33
    $region32: #{_forward_core.1} parent=1 // pred_region
      %59 = dma.done [#allocation3], 1408
    $region33: #{_forward_core.1} parent=1 // pred_fallthru
      _
    // Predicated region
    $region34: #{_forward_core.1} parent=1 // pred_check
      _
    $region35: #{_forward_core.1} parent=1 // pred_check_branch
      %61 = sbr.rel (0) target = $region37
    $region36: #{_forward_core.1} parent=1 // pred_region
      %62 = dma.done [#allocation7], 1024
    $region37: #{_forward_core.1} parent=1 // pred_fallthru
      _
    %63 = sfence
    %v65 = vld [vmem:[%s1] sm:$0xf]
    %v66 = vld [vmem:[%s2] sm:$0xff]
    %v67 = vld [vmem:[%s3] sm:$0xff]
    %v68 = vld [vmem:[#allocation6 + $0x20] sm:$0xff]
    %v69 = vld [vmem:[#allocation6 + $0x28] sm:$0xff]
    %v70 = vld [vmem:[#allocation6 + $0x30] sm:$0xff]
    %v71 = vld [vmem:[#allocation6 + $0x38] sm:$0xff]
    %v72 = vld [vmem:[#allocation6] sm:$0xff]
    %v73 = vld [vmem:[#allocation6 + $0x8] sm:$0xff]
    %v74 = vld [vmem:[#allocation6 + $0x10] sm:$0x11]
    %v75 = vunpack.c.l.bf16 %v74
    %v76 = vunpack.c.h.bf16 %v74
    %v77 = vld [vmem:[#allocation5] sm:$0xf]
    %v78 = vld [vmem:[#allocation5 + $0x4] sm:$0xf]
    %v79 = vld [vmem:[#allocation5 + $0x8] sm:$0xf]
    %v80 = vld [vmem:[#allocation5 + $0xc] sm:$0xf]
    %v81 = vld [vmem:[#allocation5 + $0x10] sm:$0xf]
    %v82 = vld [vmem:[#allocation5 + $0x14] sm:$0xf]
    %v83 = vld [vmem:[#allocation5 + $0x18] sm:$0xf]
    %v84 = vld [vmem:[#allocation5 + $0x20] sm:$0xf]
    %v85 = vld [vmem:[#allocation5 + $0x24] sm:$0xf]
    %v86 = vld [vmem:[#allocation5 + $0x28] sm:$0xf]
    %v87 = vld [vmem:[#allocation5 + $0x2c] sm:$0xf]
    %v88 = vld [vmem:[#allocation5 + $0x30] sm:$0xf]
    %v89 = vld [vmem:[#allocation5 + $0x34] sm:$0xf]
    %v90 = vld [vmem:[#allocation5 + $0x38] sm:$0xf]
    %v91 = vld [vmem:[#allocation5 + $0x40] sm:$0xf]
    %v92 = vld [vmem:[#allocation5 + $0x48] sm:$0x1]
    %v93 = vunpack.c.l.bf16 %v92
    %v94 = vld [vmem:[#allocation5 + $0x4c] sm:$0x1]
    %v95 = vunpack.c.l.bf16 %v94
    %v96 = vld [vmem:[#allocation5 + $0x50] sm:$0x1]
    %v97 = vunpack.c.l.bf16 %v96
    %v98 = vld [vmem:[#allocation5 + $0x54] sm:$0x1]
    %v99 = vunpack.c.l.bf16 %v98
    %v102 = vunpack.c.l.s4 1983009808
    %v103 = vunpack.c.0.s8 %v102
    %v104 = vlaneseq
    %v105 = vshrl.u32 %v104, 7
    %v106 = vsub.s32 %v103, %v105
    %v107 = vrot.slane %v65, %v106
    %v108 = vcombine.high %v107, %v107
    %v111 = vpack.c.bf16 %v107, %v107
    %v112 = vpack.c.bf16 %v108, %v108
    %v113 = vlaneseq
    %v114 = vshrl.u32 %v113, 7
    %v115 = vsub.s32 0, %v114
    %v116 = vrot.slane %v93, %v115
    %v121 = vunpack.c.l.b16 %v68
    %v122 = vunpack.c.h.b16 %v68
    %v123 = vunpack.c.l.b16 %v69
    %v124 = vunpack.c.h.b16 %v69
    %v125 = vunpack.c.l.b16 %v70
    %v126 = vunpack.c.h.b16 %v70
    %v127 = vunpack.c.l.b16 %v71
    %v128 = vunpack.c.h.b16 %v71
    %v129 = vpack.c.b16 %v123, %v121
    %v130 = vpack.c.b16 %v124, %v122
    %v131 = vpack.c.b16 %v127, %v125
    %v132 = vpack.c.b16 %v128, %v126
    %137 = vmatprep.subr.bf16.mxu0 %v130
    %138 = vmatpush1.bf16.xpose.msra.mxu0 %v129
    %139 = vmatprep.subr.bf16.mxu0 %v132
    %140 = vmatpush1.bf16.xpose.msra.mxu0 %v131
    %141 = vmatprep.subr.bf16.mxu0 0
    %142 = vmatpush1.bf16.xpose.msra.mxu0 0
    %143 = vmatprep.subr.bf16.mxu0 0
    %144 = vmatpush1.bf16.xpose.msra.mxu0 0
    %145 = vmatprep.subr.bf16.mxu0 0
    %146 = vmatpush1.bf16.xpose.msra.mxu0 0
    %147 = vmatprep.subr.bf16.mxu0 0
    %148 = vmatpush1.bf16.xpose.msra.mxu0 0
    %149 = vmatprep.subr.bf16.mxu0 0
    %150 = vmatpush1.bf16.xpose.msra.mxu0 0
    %151 = vmatprep.subr.bf16.mxu0 0
    %152 = vmatpush1.bf16.xpose.msra.mxu0 0
    %153 = vmatprep.subr.bf16.mxu0 0
    %154 = vmatpush1.bf16.xpose.msra.mxu0 0
    %155 = vmatprep.subr.bf16.mxu0 0
    %156 = vmatpush1.bf16.xpose.msra.mxu0 0
    %157 = vmatprep.subr.bf16.mxu0 0
    %158 = vmatpush1.bf16.xpose.msra.mxu0 0
    %159 = vmatprep.subr.bf16.mxu0 0
    %160 = vmatpush1.bf16.xpose.msra.mxu0 0
    %161 = vmatprep.subr.bf16.mxu0 0
    %162 = vmatpush1.bf16.xpose.msra.mxu0 0
    %163 = vmatprep.subr.bf16.mxu0 0
    %164 = vmatpush1.bf16.xpose.msra.mxu0 0
    %165 = vmatprep.subr.bf16.mxu0 0
    %166 = vmatpush1.bf16.xpose.msra.mxu0 0
    %167 = vmatprep.subr.bf16.mxu0 0
    %168 = vmatpush1.bf16.xpose.msra.mxu0 0
    %169 = vmatprep.mubr.bf16.mxu0 %v112
    %170 = vmatmul.mubr.bf16.gmra.mrb[0].mxu0 %v111
    %v171 = vpop.f32.mrb[0].mxu0
    %v172 = vadd.f32 %v116, %v171
    %v173 = vpop.f32.mrb[0].mxu0
    %v174 = vpop.f32.mrb[0].mxu0
    %v175 = vpop.f32.mrb[0].mxu0
    %176 = vdwg.mxu0
    %v177 = vmax.f32 %v172, 0.0
    %v178 = vpack.c.bf16 %v177, %v177
    %v179 = vlaneseq
    %v180 = vshrl.u32 %v179, 7
    %v181 = vsub.s32 0, %v180
    %v182 = vrot.slane %v95, %v181
    %v187 = vunpack.c.l.b16 %v77
    %v188 = vunpack.c.l.b16 %v78
    %v189 = vunpack.c.l.b16 %v79
    %v190 = vunpack.c.l.b16 %v80
    %v191 = vpack.c.b16 %v188, %v187
    %v192 = vpack.c.b16 %v190, %v189
    %vm195 = vcmask 261120
    %v197 = vsel %vm195, %v178, 0
    %199 = vmatprep.subr.bf16.mxu0 0
    %200 = vmatpush1.bf16.msra.mxu0 %v191
    %201 = vmatprep.subr.bf16.mxu0 0
    %202 = vmatpush1.bf16.msra.mxu0 %v192
    %203 = vmatprep.subr.bf16.mxu0 0
    %204 = vmatpush1.bf16.msra.mxu0 0
    %205 = vmatprep.subr.bf16.mxu0 0
    %206 = vmatpush1.bf16.msra.mxu0 0
    %207 = vmatprep.subr.bf16.mxu0 0
    %208 = vmatpush1.bf16.msra.mxu0 0
    %209 = vmatprep.subr.bf16.mxu0 0
    %210 = vmatpush1.bf16.msra.mxu0 0
    %211 = vmatprep.subr.bf16.mxu0 0
    %212 = vmatpush1.bf16.msra.mxu0 0
    %213 = vmatprep.subr.bf16.mxu0 0
    %214 = vmatpush1.bf16.msra.mxu0 0
    %215 = vmatprep.subr.bf16.mxu0 0
    %216 = vmatpush1.bf16.msra.mxu0 0
    %217 = vmatprep.subr.bf16.mxu0 0
    %218 = vmatpush1.bf16.msra.mxu0 0
    %219 = vmatprep.subr.bf16.mxu0 0
    %220 = vmatpush1.bf16.msra.mxu0 0
    %221 = vmatprep.subr.bf16.mxu0 0
    %222 = vmatpush1.bf16.msra.mxu0 0
    %223 = vmatprep.subr.bf16.mxu0 0
    %224 = vmatpush1.bf16.msra.mxu0 0
    %225 = vmatprep.subr.bf16.mxu0 0
    %226 = vmatpush1.bf16.msra.mxu0 0
    %227 = vmatprep.subr.bf16.mxu0 0
    %228 = vmatpush1.bf16.msra.mxu0 0
    %229 = vmatprep.subr.bf16.mxu0 0
    %230 = vmatpush1.bf16.msra.mxu0 0
    %231 = vmatprep.mubr.bf16.mxu0 0
    %232 = vmatmul.mubr.bf16.gmra.mrb[0].mxu0 %v197
    %v233 = vpop.f32.mrb[0].mxu0
    %v234 = vadd.f32 %v182, %v233
    %v235 = vpop.f32.mrb[0].mxu0
    %v236 = vpop.f32.mrb[0].mxu0
    %v237 = vpop.f32.mrb[0].mxu0
    %238 = vdwg.mxu0
    %v239 = vpack.c.bf16 %v234, %v234
    %v240 = vlaneseq
    %v241 = vshrl.u32 %v240, 7
    %v242 = vsub.s32 0, %v241
    %v243 = vrot.slane %v75, %v242
    %v244 = vlaneseq
    %v245 = vshrl.u32 %v244, 7
    %v246 = vsub.s32 0, %v245
    %v247 = vrot.slane %v76, %v246
    %v250 = vunpack.c.l.b16 %v72
    %v251 = vunpack.c.h.b16 %v72
    %v252 = vunpack.c.l.b16 %v73
    %v253 = vunpack.c.h.b16 %v73
    %v254 = vpack.c.b16 %v252, %v250
    %v255 = vpack.c.b16 %v253, %v251
    %vm258 = vcmask 130048
    %v260 = vsel %vm258, %v239, 0
    %262 = vmatprep.subr.bf16.mxu0 %v255
    %263 = vmatpush1.bf16.msra.mxu0 %v254
    %264 = vmatprep.subr.bf16.mxu0 0
    %265 = vmatpush1.bf16.msra.mxu0 0
    %266 = vmatprep.subr.bf16.mxu0 0
    %267 = vmatpush1.bf16.msra.mxu0 0
    %268 = vmatprep.subr.bf16.mxu0 0
    %269 = vmatpush1.bf16.msra.mxu0 0
    %270 = vmatprep.subr.bf16.mxu0 0
    %271 = vmatpush1.bf16.msra.mxu0 0
    %272 = vmatprep.subr.bf16.mxu0 0
    %273 = vmatpush1.bf16.msra.mxu0 0
    %274 = vmatprep.subr.bf16.mxu0 0
    %275 = vmatpush1.bf16.msra.mxu0 0
    %276 = vmatprep.subr.bf16.mxu0 0
    %277 = vmatpush1.bf16.msra.mxu0 0
    %278 = vmatprep.subr.bf16.mxu0 0
    %279 = vmatpush1.bf16.msra.mxu0 0
    %280 = vmatprep.subr.bf16.mxu0 0
    %281 = vmatpush1.bf16.msra.mxu0 0
    %282 = vmatprep.subr.bf16.mxu0 0
    %283 = vmatpush1.bf16.msra.mxu0 0
    %284 = vmatprep.subr.bf16.mxu0 0
    %285 = vmatpush1.bf16.msra.mxu0 0
    %286 = vmatprep.subr.bf16.mxu0 0
    %287 = vmatpush1.bf16.msra.mxu0 0
    %288 = vmatprep.subr.bf16.mxu0 0
    %289 = vmatpush1.bf16.msra.mxu0 0
    %290 = vmatprep.subr.bf16.mxu0 0
    %291 = vmatpush1.bf16.msra.mxu0 0
    %292 = vmatprep.subr.bf16.mxu0 0
    %293 = vmatpush1.bf16.msra.mxu0 0
    %294 = vmatprep.mubr.bf16.mxu0 0
    %295 = vmatmul.mubr.bf16.gmra.mrb[0].mxu0 %v260
    %v296 = vpop.f32.mrb[0].mxu0
    %v297 = vadd.f32 %v243, %v296
    %v298 = vpop.f32.mrb[0].mxu0
    %v299 = vadd.f32 %v247, %v298
    %v300 = vpop.f32.mrb[0].mxu0
    %v301 = vpop.f32.mrb[0].mxu0
    %302 = vdwg.mxu0
    %v303 = vsub.f32 %v297, %v107
    %v304 = vsub.f32 %v299, %v108
    %v305 = vmul.f32 %v303, %v303
    %v306 = vmul.f32 %v304, %v304
    %vm307 = vcmask 1041408
    %v308 = vsel %vm307, %v305, 0.0
    %v309 = vsel %vm307, %v306, 0.0
    %v310 = vadd.f32 %v308, %v309
    %311 = vadd.xlane.f32.xlu0 %v310
    %v312 = vpop.xlane.xlu0 %311
    %v313 = vmul.f32 %v312, -0.5
    %v314 = vsub.f32 %v313, 235.24826
    %v315 = vmul.f32 %v234, %v234
    %vm316 = vcmask 123904
    %v317 = vsel %vm316, %v315, 0.0
    %318 = vadd.xlane.f32.xlu0 %v317
    %v319 = vpop.xlane.xlu0 %318
    %v320 = vmul.f32 %v319, 0.5
    %vm321 = vcmask 15360
    %v323 = vsel %vm321, %v91, 0
    %vm325 = vcmask 1040384
    %v326 = vsel %vm325, %v239, 0
    %328 = vmatprep.subr.bf16.mxu0 0
    %329 = vmatpush1.bf16.msra.mxu0 %v326
    %330 = vmatprep.subr.bf16.mxu0 0
    %331 = vmatpush1.bf16.msra.mxu0 0
    %332 = vmatprep.subr.bf16.mxu0 0
    %333 = vmatpush1.bf16.msra.mxu0 0
    %334 = vmatprep.subr.bf16.mxu0 0
    %335 = vmatpush1.bf16.msra.mxu0 0
    %336 = vmatprep.subr.bf16.mxu0 0
    %337 = vmatpush1.bf16.msra.mxu0 0
    %338 = vmatprep.subr.bf16.mxu0 0
    %339 = vmatpush1.bf16.msra.mxu0 0
    %340 = vmatprep.subr.bf16.mxu0 0
    %341 = vmatpush1.bf16.msra.mxu0 0
    %342 = vmatprep.subr.bf16.mxu0 0
    %343 = vmatpush1.bf16.msra.mxu0 0
    %344 = vmatprep.subr.bf16.mxu0 0
    %345 = vmatpush1.bf16.msra.mxu0 0
    %346 = vmatprep.subr.bf16.mxu0 0
    %347 = vmatpush1.bf16.msra.mxu0 0
    %348 = vmatprep.subr.bf16.mxu0 0
    %349 = vmatpush1.bf16.msra.mxu0 0
    %350 = vmatprep.subr.bf16.mxu0 0
    %351 = vmatpush1.bf16.msra.mxu0 0
    %352 = vmatprep.subr.bf16.mxu0 0
    %353 = vmatpush1.bf16.msra.mxu0 0
    %354 = vmatprep.subr.bf16.mxu0 0
    %355 = vmatpush1.bf16.msra.mxu0 0
    %356 = vmatprep.subr.bf16.mxu0 0
    %357 = vmatpush1.bf16.msra.mxu0 0
    %358 = vmatprep.subr.bf16.mxu0 0
    %359 = vmatpush1.bf16.msra.mxu0 0
    %360 = vmatprep.mubr.bf16.mxu0 0
    %361 = vmatmul.mubr.bf16.gmra.mrb[0].mxu0 %v323
    %v362 = vpop.f32.mrb[0].mxu0
    %v363 = vadd.f32 0.0, %v362
    %v364 = vpop.f32.mrb[0].mxu0
    %v365 = vpop.f32.mrb[0].mxu0
    %v366 = vpop.f32.mrb[0].mxu0
    %367 = vdwg.mxu0
    %369 = vrot.lane.b32.xlu0 %v363, 8
    %v370 = vpop.permute.xlu0 %369
    %vm372 = vcmask 64512
    %v373 = vsel %vm372, %v66, %v370
    %v374 = vpack.c.bf16 %v373, %v373
    %v375 = vlaneseq
    %v376 = vshrl.u32 %v375, 7
    %v377 = vsub.s32 0, %v376
    %v378 = vrot.slane %v97, %v377
    %v382 = vunpack.c.l.b16 %v81
    %v383 = vunpack.c.l.b16 %v82
    %v384 = vunpack.c.l.b16 %v83
    %v385 = vpack.c.b16 %v383, %v382
    %v386 = vpack.c.b16 %v384, %v384
    %vm388 = vcmask 195584
    %v390 = vsel %vm388, %v374, 0
    %vm392 = vcmask 1043456
    %v394 = vsel %vm392, %v386, 0
    %396 = vmatprep.subr.bf16.mxu0 0
    %397 = vmatpush1.bf16.msra.mxu0 %v385
    %398 = vmatprep.subr.bf16.mxu0 0
    %399 = vmatpush1.bf16.msra.mxu0 %v394
    %400 = vmatprep.subr.bf16.mxu0 0
    %401 = vmatpush1.bf16.msra.mxu0 0
    %402 = vmatprep.subr.bf16.mxu0 0
    %403 = vmatpush1.bf16.msra.mxu0 0
    %404 = vmatprep.subr.bf16.mxu0 0
    %405 = vmatpush1.bf16.msra.mxu0 0
    %406 = vmatprep.subr.bf16.mxu0 0
    %407 = vmatpush1.bf16.msra.mxu0 0
    %408 = vmatprep.subr.bf16.mxu0 0
    %409 = vmatpush1.bf16.msra.mxu0 0
    %410 = vmatprep.subr.bf16.mxu0 0
    %411 = vmatpush1.bf16.msra.mxu0 0
    %412 = vmatprep.subr.bf16.mxu0 0
    %413 = vmatpush1.bf16.msra.mxu0 0
    %414 = vmatprep.subr.bf16.mxu0 0
    %415 = vmatpush1.bf16.msra.mxu0 0
    %416 = vmatprep.subr.bf16.mxu0 0
    %417 = vmatpush1.bf16.msra.mxu0 0
    %418 = vmatprep.subr.bf16.mxu0 0
    %419 = vmatpush1.bf16.msra.mxu0 0
    %420 = vmatprep.subr.bf16.mxu0 0
    %421 = vmatpush1.bf16.msra.mxu0 0
    %422 = vmatprep.subr.bf16.mxu0 0
    %423 = vmatpush1.bf16.msra.mxu0 0
    %424 = vmatprep.subr.bf16.mxu0 0
    %425 = vmatpush1.bf16.msra.mxu0 0
    %426 = vmatprep.subr.bf16.mxu0 0
    %427 = vmatpush1.bf16.msra.mxu0 0
    %428 = vmatprep.mubr.bf16.mxu0 0
    %429 = vmatmul.mubr.bf16.gmra.mrb[0].mxu0 %v390
    %v430 = vpop.f32.mrb[0].mxu0
    %v431 = vadd.f32 %v378, %v430
    %v432 = vpop.f32.mrb[0].mxu0
    %v433 = vpop.f32.mrb[0].mxu0
    %v434 = vpop.f32.mrb[0].mxu0
    %435 = vdwg.mxu0
    %v436 = vmax.f32 %v431, 0.0
    %v437 = vpack.c.bf16 %v436, %v436
    %v438 = vlaneseq
    %v439 = vshrl.u32 %v438, 7
    %v440 = vsub.s32 0, %v439
    %v441 = vrot.slane %v99, %v440
    %v446 = vunpack.c.l.b16 %v84
    %v447 = vunpack.c.l.b16 %v85
    %v448 = vunpack.c.l.b16 %v86
    %v449 = vunpack.c.l.b16 %v87
    %v450 = vpack.c.b16 %v447, %v446
    %v451 = vpack.c.b16 %v449, %v448
    %v455 = vsel %vm195, %v437, 0
    %457 = vmatprep.subr.bf16.mxu0 0
    %458 = vmatpush1.bf16.msra.mxu0 %v450
    %459 = vmatprep.subr.bf16.mxu0 0
    %460 = vmatpush1.bf16.msra.mxu0 %v451
    %461 = vmatprep.subr.bf16.mxu0 0
    %462 = vmatpush1.bf16.msra.mxu0 0
    %463 = vmatprep.subr.bf16.mxu0 0
    %464 = vmatpush1.bf16.msra.mxu0 0
    %465 = vmatprep.subr.bf16.mxu0 0
    %466 = vmatpush1.bf16.msra.mxu0 0
    %467 = vmatprep.subr.bf16.mxu0 0
    %468 = vmatpush1.bf16.msra.mxu0 0
    %469 = vmatprep.subr.bf16.mxu0 0
    %470 = vmatpush1.bf16.msra.mxu0 0
    %471 = vmatprep.subr.bf16.mxu0 0
    %472 = vmatpush1.bf16.msra.mxu0 0
    %473 = vmatprep.subr.bf16.mxu0 0
    %474 = vmatpush1.bf16.msra.mxu0 0
    %475 = vmatprep.subr.bf16.mxu0 0
    %476 = vmatpush1.bf16.msra.mxu0 0
    %477 = vmatprep.subr.bf16.mxu0 0
    %478 = vmatpush1.bf16.msra.mxu0 0
    %479 = vmatprep.subr.bf16.mxu0 0
    %480 = vmatpush1.bf16.msra.mxu0 0
    %481 = vmatprep.subr.bf16.mxu0 0
    %482 = vmatpush1.bf16.msra.mxu0 0
    %483 = vmatprep.subr.bf16.mxu0 0
    %484 = vmatpush1.bf16.msra.mxu0 0
    %485 = vmatprep.subr.bf16.mxu0 0
    %486 = vmatpush1.bf16.msra.mxu0 0
    %487 = vmatprep.subr.bf16.mxu0 0
    %488 = vmatpush1.bf16.msra.mxu0 0
    %489 = vmatprep.mubr.bf16.mxu0 0
    %490 = vmatmul.mubr.bf16.gmra.mrb[0].mxu0 %v455
    %v491 = vpop.f32.mrb[0].mxu0
    %v492 = vadd.f32 %v441, %v491
    %v493 = vpop.f32.mrb[0].mxu0
    %v494 = vpop.f32.mrb[0].mxu0
    %v495 = vpop.f32.mrb[0].mxu0
    %496 = vdwg.mxu0
    %v497 = vmax.f32 %v492, -6.0
    %v498 = vmin.f32 %v497, 4.0
    %v499 = vmul.f32 %v498, 1.442695
    %v500 = vpow.pop %v499
    %502 = vrot.lane.b32.xlu0 %v67, 16
    %v503 = vpop.permute.xlu0 %502
    %v505 = vmul.f32 %v500, %v503
    %507 = vrot.lane.b32.xlu0 %v505, 112
    %v508 = vpop.permute.xlu0 %507
    %v510 = vadd.f32 %v492, %v508
    %v511 = vmul.f32 %v67, %v67
    %v512 = vsel %vm258, %v511, 0.0
    %513 = vadd.xlane.f32.xlu0 %v512
    %v514 = vpop.xlane.xlu0 %513
    %v515 = vmul.f32 %v514, -0.5
    %517 = vrot.lane.b32.xlu0 %v498, 112
    %v518 = vpop.permute.xlu0 %517
    %v520 = vsel %vm258, %v518, 0.0
    %521 = vadd.xlane.f32.xlu0 %v520
    %v522 = vpop.xlane.xlu0 %521
    %v523 = vsub.f32 %v515, %v522
    %v524 = vsub.f32 %v523, 14.703016
    %526 = vrot.lane.b32.xlu0 %v66, 16
    %v527 = vpop.permute.xlu0 %526
    %v529 = vsel %vm258, %v510, %v527
    %v530 = vpack.c.bf16 %v529, %v529
    %v534 = vunpack.c.l.b16 %v88
    %v535 = vunpack.c.l.b16 %v89
    %v536 = vunpack.c.l.b16 %v90
    %v537 = vpack.c.b16 %v535, %v534
    %v538 = vpack.c.b16 %v536, %v536
    %v541 = vsel %vm388, %v530, 0
    %v544 = vsel %vm392, %v538, 0
    %546 = vmatprep.subr.bf16.mxu0 0
    %547 = vmatpush1.bf16.msra.mxu0 %v537
    %548 = vmatprep.subr.bf16.mxu0 0
    %549 = vmatpush1.bf16.msra.mxu0 %v544
    %550 = vmatprep.subr.bf16.mxu0 0
    %551 = vmatpush1.bf16.msra.mxu0 0
    %552 = vmatprep.subr.bf16.mxu0 0
    %553 = vmatpush1.bf16.msra.mxu0 0
    %554 = vmatprep.subr.bf16.mxu0 0
    %555 = vmatpush1.bf16.msra.mxu0 0
    %556 = vmatprep.subr.bf16.mxu0 0
    %557 = vmatpush1.bf16.msra.mxu0 0
    %558 = vmatprep.subr.bf16.mxu0 0
    %559 = vmatpush1.bf16.msra.mxu0 0
    %560 = vmatprep.subr.bf16.mxu0 0
    %561 = vmatpush1.bf16.msra.mxu0 0
    %562 = vmatprep.subr.bf16.mxu0 0
    %563 = vmatpush1.bf16.msra.mxu0 0
    %564 = vmatprep.subr.bf16.mxu0 0
    %565 = vmatpush1.bf16.msra.mxu0 0
    %566 = vmatprep.subr.bf16.mxu0 0
    %567 = vmatpush1.bf16.msra.mxu0 0
    %568 = vmatprep.subr.bf16.mxu0 0
    %569 = vmatpush1.bf16.msra.mxu0 0
    %570 = vmatprep.subr.bf16.mxu0 0
    %571 = vmatpush1.bf16.msra.mxu0 0
    %572 = vmatprep.subr.bf16.mxu0 0
    %573 = vmatpush1.bf16.msra.mxu0 0
    %574 = vmatprep.subr.bf16.mxu0 0
    %575 = vmatpush1.bf16.msra.mxu0 0
    %576 = vmatprep.subr.bf16.mxu0 0
    %577 = vmatpush1.bf16.msra.mxu0 0
    %578 = vmatprep.mubr.bf16.mxu0 0
    %579 = vmatmul.mubr.bf16.gmra.mrb[0].mxu0 %v541
    %v580 = vpop.f32.mrb[0].mxu0
    %v581 = vadd.f32 0.0, %v580
    %v582 = vpop.f32.mrb[0].mxu0
    %v583 = vpop.f32.mrb[0].mxu0
    %v584 = vpop.f32.mrb[0].mxu0
    %585 = vdwg.mxu0
    %v586 = vmul.f32 %v581, %v581
    %v587 = vsel %vm258, %v586, 0.0
    %588 = vadd.xlane.f32.xlu0 %v587
    %v589 = vpop.xlane.xlu0 %588
    %v590 = vmul.f32 %v510, %v510
    %v591 = vsel %vm258, %v590, 0.0
    %592 = vadd.xlane.f32.xlu0 %v591
    %v593 = vpop.xlane.xlu0 %592
    %v594 = vmul.f32 %v593, 0.1
    %v595 = vadd.f32 %v589, %v594
    %s596 = sld [smem:[#allocation2]]
    %s597 = sld [smem:[#allocation2 + $0x1]]
    %s598 = sld [smem:[#allocation2 + $0x2]]
    %s599 = sld [smem:[#allocation2 + $0x3]]
    %vm600 = vcmask 7168
    %v601 = vsel %vm600, %v595, 0.0
    %602 = vadd.xlane.f32.xlu0 %v601
    %v603 = vpop.xlane.xlu0 %602
    %v604 = vrot.slane %v603, 4
    %v605 = vadd.f32 %v603, %v604
    %v606 = vrot.slane %v605, 2
    %v607 = vadd.f32 %v605, %v606
    %v608 = vrot.slane %v607, 1
    %v609 = vadd.f32 %v607, %v608
    %s610 = vtos %v609
    %v611 = vstv %s610
    %v612 = vrcp.pop 8.0
    %v613 = vmul.f32 %v611, %v612
    %v614 = vsel %vm600, %v524, 0.0
    %615 = vadd.xlane.f32.xlu0 %v614
    %v616 = vpop.xlane.xlu0 %615
    %v617 = vrot.slane %v616, 4
    %v618 = vadd.f32 %v616, %v617
    %v619 = vrot.slane %v618, 2
    %v620 = vadd.f32 %v618, %v619
    %v621 = vrot.slane %v620, 1
    %v622 = vadd.f32 %v620, %v621
    %s623 = vtos %v622
    %v624 = vstv %s623
    %v625 = vmul.f32 %v624, %v612
    %vm626 = vcmask 1024
    %v627 = vsel %vm626, %v314, 0.0
    %628 = vadd.xlane.f32.xlu0 %v627
    %v629 = vpop.xlane.xlu0 %628
    %v630 = vrot.slane %v629, 4
    %v631 = vadd.f32 %v629, %v630
    %v632 = vrot.slane %v631, 2
    %v633 = vadd.f32 %v631, %v632
    %v634 = vrot.slane %v633, 1
    %v635 = vadd.f32 %v633, %v634
    %s636 = vtos %v635
    %v637 = vstv %s636
    %v638 = vrcp.pop 2.0
    %v639 = vmul.f32 %v637, %v638
    %v640 = vsel %vm626, %v320, 0.0
    %641 = vadd.xlane.f32.xlu0 %v640
    %v642 = vpop.xlane.xlu0 %641
    %v643 = vrot.slane %v642, 4
    %v644 = vadd.f32 %v642, %v643
    %v645 = vrot.slane %v644, 2
    %v646 = vadd.f32 %v644, %v645
    %v647 = vrot.slane %v646, 1
    %v648 = vadd.f32 %v646, %v647
    %s649 = vtos %v648
    %v650 = vstv %s649
    %v651 = vmul.f32 %v650, %v638
    %v652 = vstv %s596
    %v653 = vmul.f32 %v652, %v613
    %v654 = vstv %s597
    %v655 = vmul.f32 %v654, %v625
    %v656 = vadd.f32 %v653, %v655
    %v657 = vstv %s598
    %v658 = vmul.f32 %v657, %v639
    %v659 = vsub.f32 %v656, %v658
    %v660 = vstv %s599
    %v661 = vmul.f32 %v660, %v651
    %v662 = vadd.f32 %v659, %v661
    %v663 = vsel %vm600, %v662, %v613
    %v664 = vsel %vm321, %v663, %v625
    %vm665 = vcmask 23552
    %v666 = vsel %vm665, %v664, %v639
    %vm667 = vcmask 31744
    %v668 = vsel %vm667, %v666, %v651
    %v669 = vlaneseq
    %v670 = vshrl.u32 %v669, 7
    %v671 = vsub.s32 0, %v670
    %v672 = vrot.slane %v668, %v671
    %674 = vrot.lane.b32.xlu0 %v672, 17
    %v675 = vpop.permute.xlu0 %674
    %v677 = vsel %vm258, %v510, %v524
    %vm678 = vcmask 138240
    %v679 = vsel %vm678, %v677, %v675
    %vm680 = vcmask 179200
    %v681 = vsel %vm680, %v679, 0.0
    %682 = vst [vmem:[%s6] sm:$0xff] %v681
    // Predicated region
    $region38: #{_forward_core.1} parent=1 // pred_check
      _
    $region39: #{_forward_core.1} parent=1 // pred_check_branch
      %684 = sbr.rel (0) target = $region41
    $region40: #{_forward_core.1} parent=1 // pred_region
      _
    $region41: #{_forward_core.1} parent=1 // pred_fallthru
      _
    // Predicated region
    $region42: #{_forward_core.1} parent=1 // pred_check
      _
    $region43: #{_forward_core.1} parent=1 // pred_check_branch
      %686 = sbr.rel (0) target = $region45
    $region44: #{_forward_core.1} parent=1 // pred_region
      _
    $region45: #{_forward_core.1} parent=1 // pred_fallthru
      _
    %687 = vsyncpa [#allocation3], 1
    %688 = vsyncpa [#allocation7], 1
    %689 = vsyncpa [#allocation4], 1

</llo_original>
